<compile_context>
chip_gen: v7x
topology: tpu7x:2x2x1
jax: 0.10.0
libtpu: 0.0.40
codegen_flags: <defaults>
</compile_context>

<pallas_src>
import math

import jax
import jax.numpy as jnp
from jax.experimental import pallas as pl
from jax.experimental.pallas import tpu as pltpu

_SQRT_2_OVER_PI = math.sqrt(2.0 / math.pi)
_GELU_COEF = 0.044715
_C2 = _SQRT_2_OVER_PI * _GELU_COEF  # hoisted constant product

_LANES = 128
_TARGET_BLOCK_BYTES = 4 * 1024 * 1024   # ~4 MiB per buffer (per perf review)
_VMEM_LIMIT_BYTES = 32 * 1024 * 1024    # explicit scoped-VMEM limit, all gens
_SMALL_INPUT_ELEMS = 64 * 1024          # below this, plain jnp wins


def _gelu_kernel(x_ref, o_ref):
    # Always compute in f32 (matches PyTorch half-dtype upcast; no-op for f32).
    x = x_ref[...].astype(jnp.float32)
    x2 = x * x
    inner = x * (_SQRT_2_OVER_PI + _C2 * x2)   # sqrt(2/pi)*(x + 0.044715*x^3)
    t = jnp.tanh(inner)                        # EUP slot; effectively free here
    half_x = 0.5 * x
    # NOTE: on a masked partial last block, rows past the array edge hold
    # garbage; their stores are dropped by Pallas, so this is correct.
    o_ref[...] = (half_x + half_x * t).astype(o_ref.dtype)


def _gelu_f32_math(x):
    """Plain jnp tanh-GELU (f32 compute), used for tiny inputs and tails."""
    xf = x.astype(jnp.float32)
    x2 = xf * xf
    inner = xf * (_SQRT_2_OVER_PI + _C2 * x2)
    half = 0.5 * xf
    return (half + half * jnp.tanh(inner)).astype(x.dtype)


def gelu_pallas(x, *, min_pallas_elements=_SMALL_INPUT_ELEMS, block_rows=None):
    """Elementwise tanh-GELU matching the PyTorch module, any input shape.

    min_pallas_elements: inputs smaller than this use a fused jnp fast path.
    block_rows: optional override of the row-tile size (testing / tuning).
    """
    orig_shape = x.shape
    dtype = x.dtype
    n = x.size
    if n == 0:
        return x
    if n < min_pallas_elements:
        # Tiny activations: kernel dispatch overhead dominates; let XLA fuse.
        return _gelu_f32_math(x)

    itemsize = jnp.dtype(dtype).itemsize
    flat = x.reshape(-1)                      # free (row-major bitcast)

    n_main = (n // _LANES) * _LANES           # 128-aligned prefix
    tail = None
    if n_main != n:
        # Lane-unaligned total size: kernel handles the aligned prefix; the
        # < 128-element tail is computed with jnp (no full-array pad/slice).
        tail = flat[n_main:]
        main = flat[:n_main]
    else:
        main = flat

    out_parts = []
    if n_main > 0:
        x2d = main.reshape(-1, _LANES)        # lane-dense (rows, 128) slab
        rows = x2d.shape[0]

        # dtype-scaled tile: ~4 MiB per buffer regardless of itemsize
        # (f32 -> 8192 rows, bf16 -> 16384 rows). Always a multiple of 8.
        if block_rows is None:
            tile_rows = max(8, _TARGET_BLOCK_BYTES // (_LANES * itemsize))
        else:
            tile_rows = block_rows
        # Small inputs: single block equal to the full array dims (always legal).
        tile_rows = min(tile_rows, rows)

        grid = (pl.cdiv(rows, tile_rows),)

        cost = pl.CostEstimate(
            flops=8 * n_main,
            transcendentals=n_main,
            bytes_accessed=2 * n_main * itemsize,
        )

        out2d = pl.pallas_call(
            _gelu_kernel,
            out_shape=jax.ShapeDtypeStruct((rows, _LANES), dtype),
            grid=grid,
            in_specs=[pl.BlockSpec((tile_rows, _LANES), lambda i: (i, 0))],
            out_specs=pl.BlockSpec((tile_rows, _LANES), lambda i: (i, 0)),
            compiler_params=pltpu.CompilerParams(
                dimension_semantics=("parallel",),
                vmem_limit_bytes=_VMEM_LIMIT_BYTES,
            ),
            cost_estimate=cost,
        )(x2d)
        out_parts.append(out2d.reshape(-1))

    if tail is not None:
        out_parts.append(_gelu_f32_math(tail))

    out_flat = out_parts[0] if len(out_parts) == 1 else jnp.concatenate(out_parts)
    return out_flat.reshape(orig_shape)


def _gelu_reference(x):
    xf = x.astype(jnp.float32)
    inner = _SQRT_2_OVER_PI * (xf + _GELU_COEF * xf * xf * xf)
    return (0.5 * xf * (1.0 + jnp.tanh(inner))).astype(x.dtype)


if __name__ == "__main__":
    key = jax.random.PRNGKey(0)
    k1, k2, k3, k4 = jax.random.split(key, 4)

    checks = []

    # 1) Module-shaped (B, C, H, W) f32 input, forced through the Pallas path.
    x1 = jax.random.normal(k1, (2, 4, 16, 16), dtype=jnp.float32)
    y1 = jax.block_until_ready(gelu_pallas(x1, min_pallas_elements=0))
    checks.append((y1, _gelu_reference(x1), 1e-5))

    # 2) Lane-unaligned total size -> aligned-prefix kernel + jnp tail.
    x2 = jax.random.normal(k2, (2, 4, 150), dtype=jnp.float32)
    y2 = jax.block_until_ready(gelu_pallas(x2, min_pallas_elements=0))
    checks.append((y2, _gelu_reference(x2), 1e-5))

    # 3) Multi-block grid with a masked partial last block (rows=44, tile=16).
    x3 = jax.random.normal(k3, (44, 128), dtype=jnp.float32)
    y3 = jax.block_until_ready(gelu_pallas(x3, min_pallas_elements=0, block_rows=16))
    checks.append((y3, _gelu_reference(x3), 1e-5))

    # 4) bf16 input (f32 compute inside the kernel, cast back to bf16).
    x4 = jax.random.normal(k4, (2, 4, 16, 16), dtype=jnp.bfloat16)
    y4 = jax.block_until_ready(gelu_pallas(x4, min_pallas_elements=0))
    checks.append((y4, _gelu_reference(x4), 5e-2))

    # 5) Default small-input fast path (no pallas_call) agrees as well.
    y5 = jax.block_until_ready(gelu_pallas(x1))
    checks.append((y5, _gelu_reference(x1), 1e-5))

    for out, ref, tol in checks:
        assert out.shape == ref.shape and out.dtype == ref.dtype
        diff = jnp.max(jnp.abs(out.astype(jnp.float32) - ref.astype(jnp.float32)))
        assert diff < tol, f"max abs diff {diff} >= {tol}"

    print("KERNEL_OK")
</pallas_src>

<mosaic_0001>
module attributes {stable_mosaic.version = 11 : i64} {
  func.func @_gelu_kernel(%arg0: i32, %arg1: memref<16x128xf32, #tpu.memory_space<vmem>>, %arg2: memref<16x128xf32, #tpu.memory_space<vmem>>) attributes {dimension_semantics = [#tpu.dimension_semantics<parallel>], iteration_bounds = array<i64: 1>, scalar_prefetch = 0 : i64, scratch_operands = 0 : i64, tpu.core_type = #tpu.core_type<tc>, window_params = [{transform_indices = @transform_0, window_bounds = array<i64: 16, 128>}, {transform_indices = @transform_1, window_bounds = array<i64: 16, 128>}]} {
    %c0 = arith.constant 0 : index
    %c0_0 = arith.constant 0 : index
    %0 = vector.load %arg1[%c0, %c0_0] : memref<16x128xf32, #tpu.memory_space<vmem>>, vector<16x128xf32>
    %1 = arith.mulf %0, %0 : vector<16x128xf32>
    %cst = arith.constant 0.0356774069 : f32
    %2 = vector.broadcast %cst : f32 to vector<16x128xf32>
    %3 = arith.mulf %2, %1 : vector<16x128xf32>
    %cst_1 = arith.constant 0.797884583 : f32
    %4 = vector.broadcast %cst_1 : f32 to vector<16x128xf32>
    %5 = arith.addf %4, %3 : vector<16x128xf32>
    %6 = arith.mulf %0, %5 : vector<16x128xf32>
    %7 = math.tanh %6 : vector<16x128xf32>
    %cst_2 = arith.constant 5.000000e-01 : f32
    %8 = vector.broadcast %cst_2 : f32 to vector<16x128xf32>
    %9 = arith.mulf %8, %0 : vector<16x128xf32>
    %10 = arith.mulf %9, %7 : vector<16x128xf32>
    %11 = arith.addf %9, %10 : vector<16x128xf32>
    %c0_3 = arith.constant 0 : index
    %c0_4 = arith.constant 0 : index
    %12 = vector.load %arg2[%c0_3, %c0_4] : memref<16x128xf32, #tpu.memory_space<vmem>>, vector<16x128xf32>
    tpu.vector_store %arg2[%c0_3, %c0_4], %11 {strides = array<i32>} : memref<16x128xf32, #tpu.memory_space<vmem>>, vector<16x128xf32>,
    return
  }
  func.func @transform_0(%arg0: i32) -> (i32, i32) {
    %c0_i32 = arith.constant 0 : i32
    %c0_i32_0 = arith.constant 0 : i32
    return %arg0, %c0_i32 : i32, i32
  }
  func.func @transform_1(%arg0: i32) -> (i32, i32) {
    %c0_i32 = arith.constant 0 : i32
    %c0_i32_0 = arith.constant 0 : i32
    return %arg0, %c0_i32 : i32, i32
  }
}

</mosaic_0001>

<llo_original>
// kernel: tpu_custom_call.1
$region0: #{tpu_custom_call.1}
  #allocation0 [shape = 'u32[]', space=smem, size = 0x4, offset = 0x4, fixed_abs, tag = 'smem constant byte address 0x4 - core index']
  #allocation1 [shape = 'u32[144,128]{1,0:T(1,128)}', space=vmem, size = 0x12000, scoped, tag = 'internal scratch']
  %s0 = inlined_call_operand.hbm [shape: f32[16,128], index: 0, kind: input, shape index: {}]
  %s1 = inlined_call_operand.hbm [shape: f32[16,128], index: 1, kind: output, shape index: {}]
  %s2 = sld [smem:[#allocation0]]
  $region18: #{tpu_custom_call.1} parent=0
    _
  %s4 = ssub.s32 1, %s2
  %s5 = scalar_select 0, %s4, %s2
  $region1: #{tpu_custom_call.1} parent=0
    #allocation2 [shape = 'u8[8192]{0}', space=vmem, size = 0x2000, scoped, tag = 'input window, operand 0, single buffered']
    #allocation3 [shape = 's32[1]{0}', space=sflag, size = 0x4, scoped, tag = 'scoped memory for tpu_custom_call.1']
    #allocation4 [shape = 's32[1]{0}', space=sflag, size = 0x4, scoped, tag = 'scoped memory for tpu_custom_call.1']
    #allocation5 [shape = 'u8[8192]{0}', space=vmem, size = 0x2000, scoped, tag = 'output window, operand 0, single buffered']
    %6 = vsyncpa [#allocation3], 0
    %7 = vsyncpa [#allocation4], 0
    // Predicated region
    $region2: #{tpu_custom_call.1} parent=1 // pred_check
      _
    $region3: #{tpu_custom_call.1} parent=1 // pred_check_branch
      %9 = sbr.rel (0) target = $region5
    $region4: #{tpu_custom_call.1} parent=1 // pred_region
      %s11 = ssub.s32 256, 256
      %12 = vsyncadd [#allocation3], %s11
      %s13 = sshll.u32 [#allocation2], 4
      %s14 = int_to_ptr.vmem [resolvable:$true] %s13
      %19 = dma.hbm_to_vmem [thread:$0]  %s0, 256, %s14, [#allocation3], 128, 128, 8
    $region5: #{tpu_custom_call.1} parent=1 // pred_fallthru
      _
    // Predicated region
    $region6: #{tpu_custom_call.1} parent=1 // pred_check
      _
    $region7: #{tpu_custom_call.1} parent=1 // pred_check_branch
      %21 = sbr.rel (0) target = $region9
    $region8: #{tpu_custom_call.1} parent=1 // pred_region
      %22 = dma.done [#allocation3], 256
    $region9: #{tpu_custom_call.1} parent=1 // pred_fallthru
      _
    %v23 = vld [vmem:[#allocation2] sm:$0xff]
    %v24 = vld [vmem:[#allocation2 + $0x8] sm:$0xff]
    %v25 = vmul.f32 %v23, %v23
    %v26 = vmul.f32 %v24, %v24
    %v27 = vmul.f32 %v25, 0.035677407
    %v28 = vmul.f32 %v26, 0.035677407
    %v29 = vadd.f32 %v27, 0.7978846
    %v30 = vadd.f32 %v28, 0.7978846
    %v31 = vmul.f32 %v23, %v29
    %v32 = vmul.f32 %v24, %v30
    %v33 = vtanh.pop %v31
    %v34 = vtanh.pop %v32
    %v35 = vmul.f32 %v23, 0.5
    %v36 = vmul.f32 %v24, 0.5
    %v37 = vmul.f32 %v35, %v33
    %v38 = vmul.f32 %v36, %v34
    %v39 = vadd.f32 %v35, %v37
    %v40 = vadd.f32 %v36, %v38
    %41 = vst [vmem:[#allocation5] sm:$0xff] %v39
    %42 = vst [vmem:[#allocation5 + $0x8] sm:$0xff] %v40
    // Predicated region
    $region10: #{tpu_custom_call.1} parent=1 // pred_check
      _
    $region11: #{tpu_custom_call.1} parent=1 // pred_check_branch
      %44 = sbr.rel (0) target = $region13
    $region12: #{tpu_custom_call.1} parent=1 // pred_region
      %s46 = ssub.s32 256, 256
      %47 = vsyncadd [#allocation4], %s46
      %s48 = sshll.u32 [#allocation5], 4
      %s49 = int_to_ptr.vmem [resolvable:$true] %s48
      %54 = dma.vmem_to_hbm [thread:$0]  %s49, 256, %s1, [#allocation4], 128, 128, 8
    $region13: #{tpu_custom_call.1} parent=1 // pred_fallthru
      _
    // Predicated region
    $region14: #{tpu_custom_call.1} parent=1 // pred_check
      _
    $region15: #{tpu_custom_call.1} parent=1 // pred_check_branch
      %56 = sbr.rel (0) target = $region17
    $region16: #{tpu_custom_call.1} parent=1 // pred_region
      %57 = dma.done [#allocation4], 256
    $region17: #{tpu_custom_call.1} parent=1 // pred_fallthru
      _
    %58 = vsyncpa [#allocation3], 1
    %59 = vsyncpa [#allocation4], 1

</llo_original>
